<compile_context>
chip_gen: v5e
topology: v5e:2x2
jax: 0.10.0
libtpu: 0.0.40
codegen_flags: <defaults>
</compile_context>

<pallas_src>
import functools

import jax
import jax.numpy as jnp
from jax import lax
from jax.experimental import pallas as pl
from jax.experimental.pallas import tpu as pltpu

_MAX_TB = 1024          # hard cap on batch-lanes per grid step
_LIVE_F32_TILES = 10    # ~2 double-buffered pred copies + ~8 live [S,S,tb] f32 temps


# ----------------------------- in-kernel helpers -----------------------------

def _rcp(x):
    """Reciprocal on the EUP (approx) + one Newton step -> ~f32 accuracy."""
    r = pl.reciprocal(x, approx=True)
    return r * (2.0 - x * r)


def _softmax(x, axis):
    m = jnp.max(x, axis=axis, keepdims=True)
    e = jnp.exp(x - m)
    return e * _rcp(jnp.sum(e, axis=axis, keepdims=True))


def _onehot_argmax(x, axis):
    """One-hot of argmax along `axis`, first index wins ties (torch.argmax)."""
    n = x.shape[axis]
    m = jnp.max(x, axis=axis, keepdims=True)
    is_max = x >= m
    iota = lax.broadcasted_iota(jnp.int32, x.shape, axis)
    first = jnp.min(jnp.where(is_max, iota, n), axis=axis, keepdims=True)
    return (iota == first).astype(x.dtype)


def _rsum01(x):
    """Sum a [A, B, TB] array over its first two axes -> (TB,).

    Axis 0 (cross-vreg) first so the bulk rides the 4-wide VALU; the single
    remaining sublane reduce goes to the XLU (1 per stat instead of A)."""
    return jnp.sum(jnp.sum(x, axis=0), axis=0)


def _masks(p_shape, t12, t21, need12, need21):
    """Build permutation masks from int32 targets (batch-last layout).

    p layout is [row i, col j, batch b].
      mask21[i, j, b] = 1 iff j == target21[b, i]
      mask12[i, j, b] = 1 iff i == target12[b, j]
    """
    mask12 = mask21 = None
    if need21:
        iota_j = lax.broadcasted_iota(jnp.int32, p_shape, 1)
        mask21 = (iota_j == t21[:, None, :]).astype(jnp.float32)
    if need12:
        iota_i = lax.broadcasted_iota(jnp.int32, p_shape, 0)
        mask12 = (iota_i == t12[None, :, :]).astype(jnp.float32)
    return mask12, mask21


# --------------------------------- kernels -----------------------------------

def _stats_kernel(pred_ref, t12_ref, t21_ref, out_ref, *, temp, stats):
    """Per-batch building blocks for ce_row / ce_rowcol / ce_l1 /
    ce_l1l2_penalty / kl_div / mask_loss.  `stats` is the ordered tuple of
    rows this variant writes; only that work is emitted."""
    p = pred_ref[...].astype(jnp.float32)           # [S, S, TB] = [row i, col j, batch]
    S = p.shape[0]
    need = frozenset(stats)
    same_temp = (temp == 1.0)
    inv_temp = jnp.float32(1.0 / temp)
    pt = p if same_temp else p * inv_temp

    need21 = bool(need & {"row_t", "row_nt"})
    need12 = bool(need & {"col_t", "col_nt"})
    mask12, mask21 = _masks(p.shape, t12_ref[...], t21_ref[...], need12, need21)

    # Gathered raw logits at target positions (shared by temp / no-temp stats).
    g_row = _rsum01(mask21 * p) if need21 else None     # sum_i p[i, t21[i]]
    g_col = _rsum01(mask12 * p) if need12 else None     # sum_j p[t12[j], j]

    cache = {}

    def exp_stats(which, axis):
        key = ("nt" if (same_temp or which == "nt") else "t", axis)
        if key not in cache:
            x = p if key[0] == "nt" else pt
            m = jnp.max(x, axis=axis, keepdims=True)
            e = jnp.exp(x - m)
            s1 = jnp.sum(e, axis=axis, keepdims=True)
            cache[key] = (m, e, s1)
        return cache[key]

    def sum_lse(which, axis):                           # sum over rows/cols of logsumexp
        m, _, s1 = exp_stats(which, axis)
        return _rsum01(m + jnp.log(s1))                 # (TB,)

    rows = {}
    if "row_t" in need:                                 # sum_i -log p_t(row i -> t21[i])
        rows["row_t"] = sum_lse("t", 1) - g_row * inv_temp
    if "col_t" in need:                                 # sum_j -log p_t(col j -> t12[j])
        rows["col_t"] = sum_lse("t", 0) - g_col * inv_temp
    if "l1" in need:
        # sum |log_softmax(pt, cols) - onehot(t21)| == S - sum(lsm)
        #   sum(lsm) = sum(pt) - S * sum_i lse_i   (no abs pass, no mask needed)
        rows["l1"] = (jnp.float32(S) - _rsum01(p) * inv_temp
                      + jnp.float32(S) * sum_lse("t", 1))
    if "penalty" in need:                               # AutoShuffleNet L1-L2 penalty
        _, e_r, s1_r = exp_stats("t", 1)
        s2_r = jnp.sum(e_r * e_r, axis=1, keepdims=True)
        _, e_c, s1_c = exp_stats("t", 0)
        s2_c = jnp.sum(e_c * e_c, axis=0, keepdims=True)
        pen_r = _rsum01(1.0 - jnp.sqrt(s2_r) * _rcp(s1_r))   # ||sm||_1 - ||sm||_2 per row
        pen_c = _rsum01(1.0 - jnp.sqrt(s2_c) * _rcp(s1_c))
        rows["penalty"] = pen_r + pen_c
    if "row_nt" in need:                                # no-temperature row NLL (kl_div, mask)
        rows["row_nt"] = sum_lse("nt", 1) - g_row
    if "col_nt" in need:                                # no-temperature col NLL (kl_div)
        rows["col_nt"] = sum_lse("nt", 0) - g_col
    if "mask" in need:                                  # mask_loss column-sum constraint
        row_amax = _onehot_argmax(p, axis=1)            # argmax(softmax,2) == argmax(logits,2)
        colsum = jnp.sum(row_amax, axis=0)              # [S(j), TB]
        rows["mask"] = jnp.sum(jnp.abs(colsum - 1.0), axis=0)

    for r, name in enumerate(stats):
        out_ref[r, :] = rows[name]


def _sinkhorn_kernel(pred_ref, t12_ref, t21_ref, out_ref, *, n_iters):
    p = pred_ref[...].astype(jnp.float32)               # [S, S, TB]
    mask12, mask21 = _masks(p.shape, t12_ref[...], t21_ref[...],
                            need12=True, need21=True)

    x = jnp.maximum(p, 0.0) + 1e-9                      # relu + eps (strictly positive)
    for _ in range(n_iters):                            # static unroll; |x| == x
        # F.normalize p=1 over dim=2 (cols, axis 1 here) then dim=1 (rows, axis 0)
        x = x * _rcp(jnp.maximum(jnp.sum(x, axis=1, keepdims=True), 1e-12))
        x = x * _rcp(jnp.maximum(jnp.sum(x, axis=0, keepdims=True), 1e-12))

    # KLDiv vs one-hot target == -log of the gathered entry; gather first so the
    # full-size log pass never materializes.
    g21 = jnp.sum(mask21 * x, axis=1)                   # [S(i), TB] = x[i, t21[i]]
    g12 = jnp.sum(mask12 * x, axis=0)                   # [S(j), TB] = x[t12[j], j]
    out_ref[0, :] = -jnp.sum(jnp.log(g21), axis=0)      # KLDiv(log_dsm, onehot21), unnormalised
    out_ref[1, :] = -jnp.sum(jnp.log(g12), axis=0)      # KLDiv(log_dsm^T, onehot12), unnormalised


def _unique_max_kernel(pred_ref, t12_ref, out_ref):
    p = pred_ref[...].astype(jnp.float32)               # [S, S, TB]
    mask12, _ = _masks(p.shape, t12_ref[...], None, need12=True, need21=False)

    row_sm = _softmax(p, axis=1)                        # softmax over dim=2
    col_sm = _softmax(p, axis=0)                        # softmax over dim=1
    row_mask = _onehot_argmax(p, axis=1)                # argmax over dim=2
    col_mask = _onehot_argmax(p, axis=0)                # argmax over dim=1
    combined = row_sm * row_mask + col_sm * col_mask
    pred_mask12 = _onehot_argmax(combined, axis=0)      # argmax over dim=1
    final = combined * pred_mask12
    # CE with class dim = rows (orig dim=1): sum_j [lse_i(final[:,j]) - final[t12[j], j]]
    m = jnp.max(final, axis=0, keepdims=True)
    lse = m + jnp.log(jnp.sum(jnp.exp(final - m), axis=0, keepdims=True))   # [1, S, TB]
    gathered = jnp.sum(mask12 * final, axis=0)                              # [S(j), TB]
    out_ref[0, :] = _rsum01(lse) - jnp.sum(gathered, axis=0)


# ------------------------------- pallas glue ----------------------------------

def _vmem_capacity_bytes():
    try:
        return int(pltpu.get_tpu_info().vmem_capacity_bytes)
    except Exception:
        return 64 * 1024 * 1024        # conservative fallback (v7x per-TC VMEM)


def _pick_tile(S, B):
    """VMEM- and generation-aware batch-lane tile.  Returns (tb, padded_B)."""
    cap = _vmem_capacity_bytes()
    budget = cap // 4                           # working-set target, leaves pipeline headroom
    per_b = S * S * 4 * _LIVE_F32_TILES         # bytes of live f32 per batch lane
    tb_max = max(1, budget // per_b)
    if B <= 128:
        # Full-dim block along batch (block last dim == array dim is always legal).
        return B, B
    tb = min(B, _MAX_TB, max(128, tb_max))
    tb = max(128, (tb // 128) * 128)            # lane-dense, 128-aligned
    # v7x megacore: make sure the "parallel" batch axis has >= 2 tiles to shard.
    if B >= 256 and -(-B // tb) < 2:
        tb = max(128, ((tb // 2) // 128) * 128)
    bp = -(-B // tb) * tb
    return tb, bp


def _call_per_batch(kernel, nrows, pred_t, *tgts):
    """pred_t: [S, S, B] (batch-last, input dtype); tgts: int32 [S, B].
    Returns [nrows, B] f32 per-batch statistics."""
    S, _, B = pred_t.shape
    tb, bp = _pick_tile(S, B)
    if bp != B:                                 # pad only the ragged tail tile
        pad = bp - B
        pred_t = jnp.pad(pred_t, ((0, 0), (0, 0), (0, pad)))
        tgts = tuple(jnp.pad(t, ((0, 0), (0, pad))) for t in tgts)

    in_specs = [pl.BlockSpec((S, S, tb), lambda b: (0, 0, b))]
    in_specs += [pl.BlockSpec((S, tb), lambda b: (0, b)) for _ in tgts]

    pred_bytes = pred_t.size * jnp.dtype(pred_t.dtype).itemsize
    cost = pl.CostEstimate(
        flops=int(40 * S * S * bp),
        transcendentals=int(4 * S * S * bp),
        bytes_accessed=int(pred_bytes + sum(t.size * 4 for t in tgts) + nrows * bp * 4),
    )
    cap = _vmem_capacity_bytes()
    out = pl.pallas_call(
        kernel,
        out_shape=jax.ShapeDtypeStruct((nrows, bp), jnp.float32),
        grid=(bp // tb,),
        in_specs=in_specs,
        out_specs=pl.BlockSpec((nrows, tb), lambda b: (0, b)),
        compiler_params=pltpu.CompilerParams(
            dimension_semantics=("parallel",),               # batch tiles shard across TCs
            vmem_limit_bytes=int(min(cap // 2, 96 * 1024 * 1024))),
        cost_estimate=cost,
    )(pred_t, *tgts)
    return out[:, :B]                            # drop batch padding lanes


# ------------------------------- module port ----------------------------------

class SetMatchLoss:
    def __init__(self, loss, ce_type="row", temperature=None, iterations=None):
        self.loss = loss
        self.temp = temperature
        self.n = iterations
        self.ce_type = ce_type
        self.loss_func = {
            "ce_rowcol": self.crossentropy_rowcol,
            "ce_row": self.crossentropy_row,
            "ce_l1": self.crossentropy_l1,
            "ce_l1l2_penalty": self.crossentropy_l1l2_penalty,
            "kl_div": self.kl_div_loss,
            "mask_loss": self.mask_loss,
            "unique_max": self.unique_max_mask_loss,
            "sinkhorn": self.sinkhorn_loss,
        }
        # TODO(synk): 'ce_l2'/'ce_l1l2' need OneHotCategorical sampling (stochastic, no clean
        #             deterministic Pallas equivalent) and 'kl_dist' references
        #             self.distance_loss which is undefined in the reference module.
        self._jitted = jax.jit(self.loss_func[self.loss])

    # ---------- layout prep (batch-last, int targets; runs inside jit) ----------
    @staticmethod
    def _prep(predictions, target12, target21):
        # TODO(synk): evaluate DMA-ing natural [tb,S,S] blocks + in-kernel einshape to
        #             drop this HBM relayout pass entirely (XLU slack now available).
        pred_t = jnp.transpose(predictions, (1, 2, 0))               # [S, S, B], input dtype
        t12_t = jnp.transpose(target12.astype(jnp.int32), (1, 0))    # [S, B]
        t21_t = jnp.transpose(target21.astype(jnp.int32), (1, 0))    # [S, B]
        return pred_t, t12_t, t21_t

    def _stats(self, predictions, target12, target21, stats):
        pred_t, t12_t, t21_t = self._prep(predictions, target12, target21)
        temp = 1.0 if self.temp is None else float(self.temp)
        kern = functools.partial(_stats_kernel, temp=temp, stats=tuple(stats))
        out = _call_per_batch(kern, len(stats), pred_t, t12_t, t21_t)
        return {name: out[i] for i, name in enumerate(stats)}

    def _ce_from_stats(self, st, B, S):
        ce = jnp.sum(st["row_t"])
        if self.ce_type == "rowcol":
            ce = ce + jnp.sum(st["col_t"])
        return ce / (B * S)

    # ------------------------------- losses -------------------------------
    def crossentropy_row(self, predictions, target12, target21):
        B, S, _ = predictions.shape
        st = self._stats(predictions, target12, target21, ["row_t"])
        return jnp.sum(st["row_t"]) / (B * S)

    def crossentropy_rowcol(self, predictions, target12, target21):
        B, S, _ = predictions.shape
        st = self._stats(predictions, target12, target21, ["row_t", "col_t"])
        return (jnp.sum(st["row_t"]) + jnp.sum(st["col_t"])) / (B * S)

    def crossentropy_l1(self, predictions, target12, target21):
        B, S, _ = predictions.shape
        names = ["row_t", "l1"] + (["col_t"] if self.ce_type == "rowcol" else [])
        st = self._stats(predictions, target12, target21, names)
        ce = self._ce_from_stats(st, B, S)
        sim = jnp.sum(st["l1"]) / (B * S * S)            # L1Loss mean over all elements
        return ce + sim

    def crossentropy_l1l2_penalty(self, predictions, target12, target21):
        B, S, _ = predictions.shape
        names = ["row_t", "penalty"] + (["col_t"] if self.ce_type == "rowcol" else [])
        st = self._stats(predictions, target12, target21, names)
        return self._ce_from_stats(st, B, S) + jnp.sum(st["penalty"])

    def kl_div_loss(self, predictions, target12, target21):
        B, S, _ = predictions.shape
        st = self._stats(predictions, target12, target21, ["row_nt", "col_nt"])
        return (jnp.sum(st["row_nt"]) + jnp.sum(st["col_nt"])) / B    # batchmean

    def mask_loss(self, predictions, target12, target21):
        B, S, _ = predictions.shape
        st = self._stats(predictions, target12, target21, ["row_nt", "mask"])
        return jnp.sum(st["row_nt"]) / (B * S) + jnp.sum(st["mask"]) / (B * S)

    def sinkhorn_loss(self, predictions, target12, target21):
        B, S, _ = predictions.shape
        pred_t, t12_t, t21_t = self._prep(predictions, target12, target21)
        n_iters = 0 if self.n is None else int(self.n)
        kern = functools.partial(_sinkhorn_kernel, n_iters=n_iters)
        st = _call_per_batch(kern, 2, pred_t, t12_t, t21_t)
        return (jnp.sum(st[0]) + jnp.sum(st[1])) / B     # batchmean x2 terms

    def unique_max_mask_loss(self, predictions, target12, target21):
        B, S, _ = predictions.shape
        pred_t, t12_t, _ = self._prep(predictions, target12, target21)
        st = _call_per_batch(_unique_max_kernel, 1, pred_t, t12_t)
        return jnp.sum(st[0]) / (B * S)

    def __call__(self, predictions, target12, target21):
        return self._jitted(predictions, target12, target21)

    forward = __call__


# ----------------------------------- main --------------------------------------

if __name__ == "__main__":
    key = jax.random.PRNGKey(0)
    B, S = 2, 8
    k1, k2 = jax.random.split(key)

    predictions = jax.random.normal(k1, (B, S, S), dtype=jnp.float32)
    # per-batch random permutations; target21 is the inverse permutation of target12
    target12 = jnp.stack(
        [jax.random.permutation(jax.random.fold_in(k2, b), S) for b in range(B)]
    ).astype(jnp.int32)
    target21 = jnp.argsort(target12, axis=1).astype(jnp.int32)

    configs = [
        ("ce_row", dict(temperature=1.0)),
        ("ce_rowcol", dict(temperature=1.0)),
        ("ce_l1", dict(ce_type="rowcol", temperature=0.5)),
        ("ce_l1l2_penalty", dict(ce_type="row", temperature=0.5)),
        ("kl_div", dict()),
        ("mask_loss", dict()),
        ("sinkhorn", dict(iterations=5)),
        ("unique_max", dict()),
    ]

    results = {}
    for name, kwargs in configs:
        mod = SetMatchLoss(name, **kwargs)
        val = mod(predictions, target12, target21)
        results[name] = jax.block_until_ready(val)

    print("KERNEL_OK")
</pallas_src>

<mosaic_0001>
module attributes {stable_mosaic.version = 11 : i64} {
  func.func @_stats_kernel(%arg0: i32, %arg1: memref<8x8x2xf32, #tpu.memory_space<vmem>>, %arg2: memref<8x2xi32, #tpu.memory_space<vmem>>, %arg3: memref<8x2xi32, #tpu.memory_space<vmem>>, %arg4: memref<1x2xf32, #tpu.memory_space<vmem>>) attributes {dimension_semantics = [#tpu.dimension_semantics<parallel>], iteration_bounds = array<i64: 1>, scalar_prefetch = 0 : i64, scratch_operands = 0 : i64, tpu.core_type = #tpu.core_type<tc>, window_params = [{transform_indices = @transform_0, window_bounds = array<i64: 8, 8, 2>}, {transform_indices = @transform_1, window_bounds = array<i64: 8, 2>}, {transform_indices = @transform_2, window_bounds = array<i64: 8, 2>}, {transform_indices = @transform_3, window_bounds = array<i64: 1, 2>}]} {
    %c0 = arith.constant 0 : index
    %c0_0 = arith.constant 0 : index
    %c0_1 = arith.constant 0 : index
    %0 = vector.load %arg1[%c0, %c0_0, %c0_1] : memref<8x8x2xf32, #tpu.memory_space<vmem>>, vector<8x8x2xf32>
    %c0_2 = arith.constant 0 : index
    %c0_3 = arith.constant 0 : index
    %1 = vector.load %arg3[%c0_2, %c0_3] : memref<8x2xi32, #tpu.memory_space<vmem>>, vector<8x2xi32>
    %2 = tpu.iota {dimensions = array<i32: 1>} : vector<8x8x2xi32>
    %3 = vector.shape_cast %1 : vector<8x2xi32> to vector<8x1x2xi32>
    %4 = vector.broadcast %3 : vector<8x1x2xi32> to vector<8x8x2xi32>
    %5 = arith.cmpi eq, %2, %4 : vector<8x8x2xi32>
    %6 = arith.extui %5 : vector<8x8x2xi1> to vector<8x8x2xi32>
    %7 = arith.sitofp %6 : vector<8x8x2xi32> to vector<8x8x2xf32>
    %8 = arith.mulf %7, %0 : vector<8x8x2xf32>
    %cst = arith.constant dense<0.000000e+00> : vector<8x2xf32>
    %9 = vector.multi_reduction <add>, %8, %cst [0] : vector<8x8x2xf32> to vector<8x2xf32>
    %cst_4 = arith.constant dense<0.000000e+00> : vector<2xf32>
    %10 = vector.multi_reduction <add>, %9, %cst_4 [0] : vector<8x2xf32> to vector<2xf32>
    %cst_5 = arith.constant dense<0xFF800000> : vector<8x2xf32>
    %11 = vector.multi_reduction <maximumf>, %0, %cst_5 [1] : vector<8x8x2xf32> to vector<8x2xf32>
    %12 = vector.shape_cast %11 : vector<8x2xf32> to vector<8x1x2xf32>
    %13 = vector.broadcast %12 : vector<8x1x2xf32> to vector<8x8x2xf32>
    %14 = arith.subf %0, %13 : vector<8x8x2xf32>
    %15 = math.exp %14 : vector<8x8x2xf32>
    %cst_6 = arith.constant dense<0.000000e+00> : vector<8x2xf32>
    %16 = vector.multi_reduction <add>, %15, %cst_6 [1] : vector<8x8x2xf32> to vector<8x2xf32>
    %17 = vector.shape_cast %16 : vector<8x2xf32> to vector<8x1x2xf32>
    %18 = math.log %17 : vector<8x1x2xf32>
    %19 = arith.addf %12, %18 : vector<8x1x2xf32>
    %cst_7 = arith.constant dense<0.000000e+00> : vector<1x2xf32>
    %20 = vector.multi_reduction <add>, %19, %cst_7 [0] : vector<8x1x2xf32> to vector<1x2xf32>
    %cst_8 = arith.constant dense<0.000000e+00> : vector<2xf32>
    %21 = vector.multi_reduction <add>, %20, %cst_8 [0] : vector<1x2xf32> to vector<2xf32>
    %cst_9 = arith.constant 1.000000e+00 : f32
    %22 = vector.broadcast %cst_9 : f32 to vector<2xf32>
    %23 = arith.mulf %10, %22 : vector<2xf32>
    %24 = arith.subf %21, %23 : vector<2xf32>
    %c0_10 = arith.constant 0 : index
    %c0_11 = arith.constant 0 : index
    %25 = vector.load %arg4[%c0_10, %c0_11] : memref<1x2xf32, #tpu.memory_space<vmem>>, vector<1x2xf32>
    %26 = vector.shape_cast %25 : vector<1x2xf32> to vector<2xf32>
    %27 = vector.shape_cast %24 : vector<2xf32> to vector<1x2xf32>
    tpu.vector_store %arg4[%c0_10, %c0_11], %27 {strides = array<i32>} : memref<1x2xf32, #tpu.memory_space<vmem>>, vector<1x2xf32>,
    return
  }
  func.func @transform_0(%arg0: i32) -> (i32, i32, i32) {
    %c0_i32 = arith.constant 0 : i32
    %c0_i32_0 = arith.constant 0 : i32
    %c0_i32_1 = arith.constant 0 : i32
    return %c0_i32, %c0_i32_0, %arg0 : i32, i32, i32
  }
  func.func @transform_1(%arg0: i32) -> (i32, i32) {
    %c0_i32 = arith.constant 0 : i32
    %c0_i32_0 = arith.constant 0 : i32
    return %c0_i32, %arg0 : i32, i32
  }
  func.func @transform_2(%arg0: i32) -> (i32, i32) {
    %c0_i32 = arith.constant 0 : i32
    %c0_i32_0 = arith.constant 0 : i32
    return %c0_i32, %arg0 : i32, i32
  }
  func.func @transform_3(%arg0: i32) -> (i32, i32) {
    %c0_i32 = arith.constant 0 : i32
    %c0_i32_0 = arith.constant 0 : i32
    return %c0_i32, %arg0 : i32, i32
  }
}

</mosaic_0001>

<llo_original>
// kernel: crossentropy_row.1
$region0: #{crossentropy_row.1}
  #allocation0 [shape = 'u32[]', space=smem, size = 0x4, offset = 0x4, fixed_abs, tag = 'smem constant byte address 0x4 - core index']
  #allocation1 [shape = 'u32[72,128]{1,0:T(1,128)}', space=vmem, size = 0x9000, scoped, tag = 'internal scratch']
  %s0 = inlined_call_operand.vmem [shape: f32[8,8,2], index: 0, kind: input, shape index: {}]
  %s1 = inlined_call_operand.vmem [shape: s32[8,2], index: 1, kind: input, shape index: {}]
  %s2 = inlined_call_operand.vmem [shape: s32[8,2], index: 2, kind: input, shape index: {}]
  %s3 = inlined_call_operand.vmem [shape: f32[1,2], index: 3, kind: output, shape index: {}]
  %s4 = sld [smem:[#allocation0]]
  $region22: #{crossentropy_row.1} parent=0
    _
  %s6 = ssub.s32 1, %s4
  %s7 = scalar_select 0, %s6, %s4
  // Predicated region
  $region2: #{crossentropy_row.1} parent=0 // pred_check
    _
  $region3: #{crossentropy_row.1} parent=0 // pred_check_branch
    %9 = sbr.rel (0) target = $region5
  $region4: #{crossentropy_row.1} parent=0 // pred_region
    _
  $region5: #{crossentropy_row.1} parent=0 // pred_fallthru
    _
  // Predicated region
  $region6: #{crossentropy_row.1} parent=0 // pred_check
    _
  $region7: #{crossentropy_row.1} parent=0 // pred_check_branch
    %11 = sbr.rel (0) target = $region9
  $region8: #{crossentropy_row.1} parent=0 // pred_region
    _
  $region9: #{crossentropy_row.1} parent=0 // pred_fallthru
    _
  // Predicated region
  $region10: #{crossentropy_row.1} parent=0 // pred_check
    _
  $region11: #{crossentropy_row.1} parent=0 // pred_check_branch
    %13 = sbr.rel (0) target = $region13
  $region12: #{crossentropy_row.1} parent=0 // pred_region
    _
  $region13: #{crossentropy_row.1} parent=0 // pred_fallthru
    _
  %v14 = vld [vmem:[%s0] sm:$0xff]
  %v15 = vld [vmem:[%s0 + $0x8] sm:$0xff]
  %v16 = vld [vmem:[%s0 + $0x10] sm:$0xff]
  %v17 = vld [vmem:[%s0 + $0x18] sm:$0xff]
  %v18 = vld [vmem:[%s0 + $0x20] sm:$0xff]
  %v19 = vld [vmem:[%s0 + $0x28] sm:$0xff]
  %v20 = vld [vmem:[%s0 + $0x30] sm:$0xff]
  %v21 = vld [vmem:[%s0 + $0x38] sm:$0xff]
  %v22 = vld [vmem:[%s2] sm:$0xff]
  %v23 = vlaneseq
  %v24 = vshrl.u32 %v23, 7
  %v25 = vrot.slane %v22, 1
  %v26 = vrot.slane %v22, 2
  %v27 = vrot.slane %v22, 3
  %v28 = vrot.slane %v22, 4
  %v29 = vrot.slane %v22, 5
  %v30 = vrot.slane %v22, 6
  %v31 = vrot.slane %v22, 7
  %v32 = vperm.slane %v22, 0
  %v33 = vperm.slane %v25, 0
  %v34 = vperm.slane %v26, 0
  %v35 = vperm.slane %v27, 0
  %v36 = vperm.slane %v28, 0
  %v37 = vperm.slane %v29, 0
  %v38 = vperm.slane %v30, 0
  %v39 = vperm.slane %v31, 0
  %vm40 = vcmp.eq.s32.totalorder %v24, %v32
  %vm41 = vcmp.eq.s32.totalorder %v24, %v33
  %vm42 = vcmp.eq.s32.totalorder %v24, %v34
  %vm43 = vcmp.eq.s32.totalorder %v24, %v35
  %vm44 = vcmp.eq.s32.totalorder %v24, %v36
  %vm45 = vcmp.eq.s32.totalorder %v24, %v37
  %vm46 = vcmp.eq.s32.totalorder %v24, %v38
  %vm47 = vcmp.eq.s32.totalorder %v24, %v39
  %v48 = vsel %vm40, 1, 0
  %v49 = vsel %vm41, 1, 0
  %v50 = vsel %vm42, 1, 0
  %v51 = vsel %vm43, 1, 0
  %v52 = vsel %vm44, 1, 0
  %v53 = vsel %vm45, 1, 0
  %v54 = vsel %vm46, 1, 0
  %v55 = vsel %vm47, 1, 0
  %v56 = vcvt.s32.f32 %v48
  %v57 = vcvt.s32.f32 %v49
  %v58 = vcvt.s32.f32 %v50
  %v59 = vcvt.s32.f32 %v51
  %v60 = vcvt.s32.f32 %v52
  %v61 = vcvt.s32.f32 %v53
  %v62 = vcvt.s32.f32 %v54
  %v63 = vcvt.s32.f32 %v55
  %v64 = vmul.f32 %v56, %v14
  %v65 = vmul.f32 %v57, %v15
  %v66 = vmul.f32 %v58, %v16
  %v67 = vmul.f32 %v59, %v17
  %v68 = vmul.f32 %v60, %v18
  %v69 = vmul.f32 %v61, %v19
  %v70 = vmul.f32 %v62, %v20
  %v71 = vmul.f32 %v63, %v21
  %vm72 = vcmask 15360
  %v73 = vsel %vm72, %v64, 0.0
  %v74 = vsel %vm72, %v65, 0.0
  %v75 = vadd.f32 %v73, %v74
  %v76 = vsel %vm72, %v66, 0.0
  %v77 = vadd.f32 %v75, %v76
  %v78 = vsel %vm72, %v67, 0.0
  %v79 = vadd.f32 %v77, %v78
  %v80 = vsel %vm72, %v68, 0.0
  %v81 = vadd.f32 %v79, %v80
  %v82 = vsel %vm72, %v69, 0.0
  %v83 = vadd.f32 %v81, %v82
  %v84 = vsel %vm72, %v70, 0.0
  %v85 = vadd.f32 %v83, %v84
  %v86 = vsel %vm72, %v71, 0.0
  %v87 = vadd.f32 %v85, %v86
  %v88 = vsel %vm72, %v87, 0.0
  %v89 = vrot.slane %v88, 4
  %v90 = vadd.f32 %v88, %v89
  %v91 = vrot.slane %v90, 2
  %v92 = vadd.f32 %v90, %v91
  %v93 = vrot.slane %v92, 1
  %v94 = vadd.f32 %v92, %v93
  %v95 = vsel %vm72, %v14, -inf
  %v96 = vrot.slane %v95, 4
  %v97 = vmax.f32 %v95, %v96
  %v98 = vrot.slane %v97, 2
  %v99 = vmax.f32 %v97, %v98
  %v100 = vrot.slane %v99, 1
  %v101 = vmax.f32 %v99, %v100
  %v102 = vsel %vm72, %v15, -inf
  %v103 = vrot.slane %v102, 4
  %v104 = vmax.f32 %v102, %v103
  %v105 = vrot.slane %v104, 2
  %v106 = vmax.f32 %v104, %v105
  %v107 = vrot.slane %v106, 1
  %v108 = vmax.f32 %v106, %v107
  %v109 = vsel %vm72, %v16, -inf
  %v110 = vrot.slane %v109, 4
  %v111 = vmax.f32 %v109, %v110
  %v112 = vrot.slane %v111, 2
  %v113 = vmax.f32 %v111, %v112
  %v114 = vrot.slane %v113, 1
  %v115 = vmax.f32 %v113, %v114
  %v116 = vsel %vm72, %v17, -inf
  %v117 = vrot.slane %v116, 4
  %v118 = vmax.f32 %v116, %v117
  %v119 = vrot.slane %v118, 2
  %v120 = vmax.f32 %v118, %v119
  %v121 = vrot.slane %v120, 1
  %v122 = vmax.f32 %v120, %v121
  %v123 = vsel %vm72, %v18, -inf
  %v124 = vrot.slane %v123, 4
  %v125 = vmax.f32 %v123, %v124
  %v126 = vrot.slane %v125, 2
  %v127 = vmax.f32 %v125, %v126
  %v128 = vrot.slane %v127, 1
  %v129 = vmax.f32 %v127, %v128
  %v130 = vsel %vm72, %v19, -inf
  %v131 = vrot.slane %v130, 4
  %v132 = vmax.f32 %v130, %v131
  %v133 = vrot.slane %v132, 2
  %v134 = vmax.f32 %v132, %v133
  %v135 = vrot.slane %v134, 1
  %v136 = vmax.f32 %v134, %v135
  %v137 = vsel %vm72, %v20, -inf
  %v138 = vrot.slane %v137, 4
  %v139 = vmax.f32 %v137, %v138
  %v140 = vrot.slane %v139, 2
  %v141 = vmax.f32 %v139, %v140
  %v142 = vrot.slane %v141, 1
  %v143 = vmax.f32 %v141, %v142
  %v144 = vsel %vm72, %v21, -inf
  %v145 = vrot.slane %v144, 4
  %v146 = vmax.f32 %v144, %v145
  %v147 = vrot.slane %v146, 2
  %v148 = vmax.f32 %v146, %v147
  %v149 = vrot.slane %v148, 1
  %v150 = vmax.f32 %v148, %v149
  %v151 = vsub.f32 %v14, %v101
  %v152 = vsub.f32 %v15, %v108
  %v153 = vsub.f32 %v16, %v115
  %v154 = vsub.f32 %v17, %v122
  %v155 = vsub.f32 %v18, %v129
  %v156 = vsub.f32 %v19, %v136
  %v157 = vsub.f32 %v20, %v143
  %v158 = vsub.f32 %v21, %v150
  %v159 = vmul.f32 %v151, 1.442695
  %v160 = vpow.pop %v159
  %v161 = vmul.f32 %v152, 1.442695
  %v162 = vpow.pop %v161
  %v163 = vmul.f32 %v153, 1.442695
  %v164 = vpow.pop %v163
  %v165 = vmul.f32 %v154, 1.442695
  %v166 = vpow.pop %v165
  %v167 = vmul.f32 %v155, 1.442695
  %v168 = vpow.pop %v167
  %v169 = vmul.f32 %v156, 1.442695
  %v170 = vpow.pop %v169
  %v171 = vmul.f32 %v157, 1.442695
  %v172 = vpow.pop %v171
  %v173 = vmul.f32 %v158, 1.442695
  %v174 = vpow.pop %v173
  %v175 = vsel %vm72, %v160, 0.0
  %v176 = vrot.slane %v175, 4
  %v177 = vadd.f32 %v175, %v176
  %v178 = vrot.slane %v177, 2
  %v179 = vadd.f32 %v177, %v178
  %v180 = vrot.slane %v179, 1
  %v181 = vadd.f32 %v179, %v180
  %v182 = vsel %vm72, %v162, 0.0
  %v183 = vrot.slane %v182, 4
  %v184 = vadd.f32 %v182, %v183
  %v185 = vrot.slane %v184, 2
  %v186 = vadd.f32 %v184, %v185
  %v187 = vrot.slane %v186, 1
  %v188 = vadd.f32 %v186, %v187
  %v189 = vsel %vm72, %v164, 0.0
  %v190 = vrot.slane %v189, 4
  %v191 = vadd.f32 %v189, %v190
  %v192 = vrot.slane %v191, 2
  %v193 = vadd.f32 %v191, %v192
  %v194 = vrot.slane %v193, 1
  %v195 = vadd.f32 %v193, %v194
  %v196 = vsel %vm72, %v166, 0.0
  %v197 = vrot.slane %v196, 4
  %v198 = vadd.f32 %v196, %v197
  %v199 = vrot.slane %v198, 2
  %v200 = vadd.f32 %v198, %v199
  %v201 = vrot.slane %v200, 1
  %v202 = vadd.f32 %v200, %v201
  %v203 = vsel %vm72, %v168, 0.0
  %v204 = vrot.slane %v203, 4
  %v205 = vadd.f32 %v203, %v204
  %v206 = vrot.slane %v205, 2
  %v207 = vadd.f32 %v205, %v206
  %v208 = vrot.slane %v207, 1
  %v209 = vadd.f32 %v207, %v208
  %v210 = vsel %vm72, %v170, 0.0
  %v211 = vrot.slane %v210, 4
  %v212 = vadd.f32 %v210, %v211
  %v213 = vrot.slane %v212, 2
  %v214 = vadd.f32 %v212, %v213
  %v215 = vrot.slane %v214, 1
  %v216 = vadd.f32 %v214, %v215
  %v217 = vsel %vm72, %v172, 0.0
  %v218 = vrot.slane %v217, 4
  %v219 = vadd.f32 %v217, %v218
  %v220 = vrot.slane %v219, 2
  %v221 = vadd.f32 %v219, %v220
  %v222 = vrot.slane %v221, 1
  %v223 = vadd.f32 %v221, %v222
  %v224 = vsel %vm72, %v174, 0.0
  %v225 = vrot.slane %v224, 4
  %v226 = vadd.f32 %v224, %v225
  %v227 = vrot.slane %v226, 2
  %v228 = vadd.f32 %v226, %v227
  %v229 = vrot.slane %v228, 1
  %v230 = vadd.f32 %v228, %v229
  %v231 = vlog2.pop %v181
  %v232 = vmul.f32 %v231, 0.6931472
  %v233 = vlog2.pop %v188
  %v234 = vmul.f32 %v233, 0.6931472
  %v235 = vlog2.pop %v195
  %v236 = vmul.f32 %v235, 0.6931472
  %v237 = vlog2.pop %v202
  %v238 = vmul.f32 %v237, 0.6931472
  %v239 = vlog2.pop %v209
  %v240 = vmul.f32 %v239, 0.6931472
  %v241 = vlog2.pop %v216
  %v242 = vmul.f32 %v241, 0.6931472
  %v243 = vlog2.pop %v223
  %v244 = vmul.f32 %v243, 0.6931472
  %v245 = vlog2.pop %v230
  %v246 = vmul.f32 %v245, 0.6931472
  %v247 = vadd.f32 %v101, %v232
  %v248 = vadd.f32 %v108, %v234
  %v249 = vadd.f32 %v115, %v236
  %v250 = vadd.f32 %v122, %v238
  %v251 = vadd.f32 %v129, %v240
  %v252 = vadd.f32 %v136, %v242
  %v253 = vadd.f32 %v143, %v244
  %v254 = vadd.f32 %v150, %v246
  %v255 = vsel %vm72, %v247, 0.0
  %v256 = vsel %vm72, %v248, 0.0
  %v257 = vadd.f32 %v255, %v256
  %v258 = vsel %vm72, %v249, 0.0
  %v259 = vadd.f32 %v257, %v258
  %v260 = vsel %vm72, %v250, 0.0
  %v261 = vadd.f32 %v259, %v260
  %v262 = vsel %vm72, %v251, 0.0
  %v263 = vadd.f32 %v261, %v262
  %v264 = vsel %vm72, %v252, 0.0
  %v265 = vadd.f32 %v263, %v264
  %v266 = vsel %vm72, %v253, 0.0
  %v267 = vadd.f32 %v265, %v266
  %v268 = vsel %vm72, %v254, 0.0
  %v269 = vadd.f32 %v267, %v268
  %v270 = vadd.f32 %v269, 0.0
  %v271 = vsub.f32 %v270, %v94
  %vm272 = vcmask 8192
  %273 = vst.msk [vmem:[%s3] sm:$0x1] %vm272, %v271
  // Predicated region
  $region14: #{crossentropy_row.1} parent=0 // pred_check
    _
  $region15: #{crossentropy_row.1} parent=0 // pred_check_branch
    %275 = sbr.rel (0) target = $region17
  $region16: #{crossentropy_row.1} parent=0 // pred_region
    _
  $region17: #{crossentropy_row.1} parent=0 // pred_fallthru
    _
  // Predicated region
  $region18: #{crossentropy_row.1} parent=0 // pred_check
    _
  $region19: #{crossentropy_row.1} parent=0 // pred_check_branch
    %277 = sbr.rel (0) target = $region21
  $region20: #{crossentropy_row.1} parent=0 // pred_region
    _
  $region21: #{crossentropy_row.1} parent=0 // pred_fallthru
    _

</llo_original>
